<compile_context>
chip_gen: v5e
topology: v5e:2x2
jax: 0.10.0
libtpu: 0.0.40
codegen_flags: <defaults>
</compile_context>

<pallas_src>
from functools import partial

import numpy as np
import jax
import jax.numpy as jnp
from jax.experimental import pallas as pl
from jax.experimental.pallas import tpu as pltpu

MU0 = 4.0 * np.pi * 1e-7


# ------------------------------ layout helpers -------------------------------

def _round_up(x, m):
    return ((x + m - 1) // m) * m


def _cdiv(a, b):
    return -(-a // b)


def _tpu_config():
    """(tensorcores_per_chip, cmul lane-tile cap, vmem_limit_bytes)."""
    kind = ""
    try:
        kind = jax.devices()[0].device_kind.lower()
    except Exception:
        pass
    if "v7" in kind:
        # 2 TCs/chip, 64 MiB physical VMEM: >=2 (even) parallel blocks,
        # moderate tiles (~3.7 MiB operands/step, double-buffered ~7.5 MiB).
        return 2, 65536, 32 * 1024 * 1024
    # v5e / v6e: single TC, 128 MiB physical VMEM -> few big lane-dense blocks
    # (~7.3 MiB operands/step, double-buffered ~15 MiB), raised scoped limit.
    return 1, 131072, 64 * 1024 * 1024


def _freq_layout(nx, ny, nz):
    """One-sided spectrum size and lane-dense tiling for the cmul kernel."""
    n = (2 * nx) * (nz + 1) * (ny + 1)        # y is the real-FFT (one-sided) axis
    num_tc, tile_cap, _ = _tpu_config()
    num_tiles = max(_cdiv(n, tile_cap), num_tc)
    if num_tiles % num_tc:
        num_tiles += num_tc - (num_tiles % num_tc)   # even #blocks on v7x
    tile = _round_up(_cdiv(n, num_tiles), 128)       # lane multiple of 128
    n_pad = tile * num_tiles                          # padding waste < 128/row
    return n, n_pad, tile


# ------------------------------- Pallas kernel -------------------------------

def _cmul_kernel(k_ref, m_ref, o_ref):
    # B_hat[r] = K[r, z] * m_z_hat  (complex, elementwise) on one lane tile.
    # k_ref: (6, T)  rows 0-2 Re(Kxz,Kyz,Kzz), rows 3-5 Im.
    # m_ref: (2, T)  row 0 Re(m_z_hat), row 1 Im(m_z_hat).
    # o_ref: (6, T)  rows 0-2 Re(B_hat), rows 3-5 Im(B_hat).
    k = k_ref[...].astype(jnp.float32)   # no-op for f32, upcast if K is bf16
    m = m_ref[...]
    kre, kim = k[0:3, :], k[3:6, :]
    mre, mim = m[0:1, :], m[1:2, :]
    o_ref[0:3, :] = kre * mre - kim * mim
    o_ref[3:6, :] = kre * mim + kim * mre


def _kspace_cmul(k_slab, m_slab, n_pad, tile, vmem_limit):
    grid = (n_pad // tile,)

    def spec(rows):
        return pl.BlockSpec((rows, tile), lambda t: (0, t))

    return pl.pallas_call(
        _cmul_kernel,
        grid=grid,
        in_specs=[spec(6), spec(2)],
        out_specs=spec(6),
        out_shape=jax.ShapeDtypeStruct((6, n_pad), jnp.float32),
        compiler_params=pltpu.CompilerParams(
            dimension_semantics=("parallel",),
            vmem_limit_bytes=vmem_limit),
    )(k_slab, m_slab)


# --------------------- geometry-only precompute (hoisted) --------------------

def precompute_demag_kz_rfft(nx, ny, nz, dx, dy, dz, z_off,
                             k_dtype=jnp.float32):
    """rFFT of the z-column of the demag tensor (Kxz, Kyz, Kzz), packed.

    Depends only on the geometry; call once and reuse for every forward.
    Returns a lane-dense (6, n_pad) slab: rows 0-2 real, rows 3-5 imag.
    """
    # TODO(synk): the original spintorch demag_tensor_fft (Newell's exact
    # prism formulas) was not provided; a deterministic point-dipole
    # approximation with the same shapes / FFT layout is used instead.
    f32 = jnp.float32
    sx, sy, sz = 1.0, dy / dx, dz / dx     # units of dx (avoids f32 underflow)
    X = (jnp.arange(2 * nx, dtype=f32) - (nx - 1)) * sx
    Z = (jnp.arange(nz + 1, dtype=f32) - (nz - 1) + z_off) * sz
    Y = (jnp.arange(2 * ny, dtype=f32) - (ny - 1)) * sy
    # (x, z, y) order so the real-FFT (one-sided) axis y is innermost.
    Xg, Zg, Yg = jnp.meshgrid(X, Z, Y, indexing="ij")   # (2nx, nz+1, 2ny)
    r2 = Xg * Xg + Yg * Yg + Zg * Zg
    r5 = jnp.where(r2 > 0, r2 ** 2.5, 1.0)
    pref = -(sx * sy * sz) / (4.0 * np.pi)

    def comp(a, b, delta):
        return jnp.where(r2 > 0, pref * (3.0 * a * b - delta * r2) / r5, 0.0)

    # Only the z column is needed: m has only the z channel nonzero.
    kz_col = jnp.stack([comp(Xg, Zg, 0.0),    # Kxz
                        comp(Yg, Zg, 0.0),    # Kyz
                        comp(Zg, Zg, 1.0)],   # Kzz
                       axis=0)                # (3, 2nx, nz+1, 2ny)
    kf = jnp.fft.rfftn(kz_col, axes=(-3, -2, -1))   # (3, 2nx, nz+1, ny+1)

    n, n_pad, _ = _freq_layout(nx, ny, nz)
    k_flat = jnp.concatenate([jnp.real(kf), jnp.imag(kf)],
                             axis=0).reshape(6, n).astype(f32)
    k_slab = jnp.pad(k_flat, ((0, 0), (0, n_pad - n)))
    return k_slab.astype(k_dtype)


# ------------------------------ forward wrapper ------------------------------

def _box_conv2d(plane, dm):
    # Grouped Conv2d(3,3,dm,padding=dm//2,groups=3) with all-ones weights on
    # the only nonzero (z) channel == dm x dm box sum, computed separably.
    # Plain jnp: at the shipped 16x16 this is KB-scale and XLA fuses it.
    # TODO(synk): at production geometries (nx ~ 4k; padded plane ~67 MiB)
    # move this to a row-tiled Pallas kernel with manual overlapping-row DMA
    # so one block never has to hold the whole plane (v7x VMEM is 64 MiB).
    nx, ny = plane.shape
    p = dm // 2
    xp = jnp.pad(plane, ((p, dm - 1 - p), (p, dm - 1 - p)))
    row = xp[0:nx, :]
    for i in range(1, dm):
        row = row + xp[i:i + nx, :]
    out = row[:, 0:ny]
    for j in range(1, dm):
        out = out + row[:, j:j + ny]
    return out


def wave_geometry_array_forward(rho, k_slab, *, dim, dx, dy, dz, B0, r0, dr,
                                dm, z_off, rx, ry, Ms_CoPt, beta=100.0):
    f32 = jnp.float32
    nx, ny = int(dim[0]), int(dim[1])
    nz = 1                                   # hardcoded in the reference forward
    n, n_pad, tile = _freq_layout(nx, ny, nz)
    _, _, vmem_limit = _tpu_config()
    assert k_slab.shape == (6, n_pad), (k_slab.shape, (6, n_pad))

    # 1) rho = tanh(rho*beta); strided scatter into the z-channel plane. [jnp]
    #    (x / y channels of m are identically zero in the reference -> dropped)
    rho_t = jnp.tanh(rho.astype(f32) * float(beta))
    plane = jnp.zeros((nx, ny), f32).at[
        r0:r0 + rx * dr:dr, r0:r0 + ry * dr:dr].set(rho_t)

    # 2) dm x dm all-ones grouped conv (z channel only), separable box sum. [jnp]
    m_z = _box_conv2d(plane, dm)

    # 3) zero-pad to (2nx, nz+1, 2ny), one-sided real FFT (y innermost). [jnp.fft]
    m_pad = jnp.zeros((2 * nx, nz + 1, 2 * ny), f32).at[:nx, 0, :ny].set(m_z)
    m_fft = jnp.fft.rfftn(m_pad, axes=(-3, -2, -1))       # (2nx, nz+1, ny+1) c64
    m_flat = jnp.stack([jnp.real(m_fft), jnp.imag(m_fft)],
                       axis=0).reshape(2, n).astype(f32)
    m_slab = jnp.pad(m_flat, ((0, 0), (0, n_pad - n)))

    # 4) B_hat[r] = K[r, z] * m_z_hat over lane-dense tiles.            [Pallas]
    b_slab = _kspace_cmul(k_slab, m_slab, n_pad, tile, vmem_limit)

    # 5) inverse real FFT, crop, scale by Ms_CoPt*mu0, add B0 to z.  [jnp, fused]
    bk = (b_slab[0:3, :n] + 1j * b_slab[3:6, :n]
          ).reshape(3, 2 * nx, nz + 1, ny + 1)
    b_demag = jnp.fft.irfftn(bk, s=(2 * nx, nz + 1, 2 * ny), axes=(-3, -2, -1))
    b = b_demag[:, nx - 1:2 * nx - 1, 0, ny - 1:2 * ny - 1] \
        * (float(Ms_CoPt) * MU0)
    b = b.at[2].add(float(B0))
    return b.astype(f32)


# ---------------------------------- main ------------------------------------

if __name__ == "__main__":
    key = jax.random.PRNGKey(0)

    # Small, self-consistent geometry (matches __init__ shape conventions).
    nx = ny = 16                 # dim
    rx = ry = 4                  # magnet array
    r0, dr, dm, z_off = 2, 3, 3, 1
    dx = dy = dz = 50e-9
    B0 = 60e-3
    Ms_CoPt = 723e3
    beta = 100.0

    # rho parameter: deterministic init (trainable in the original module).
    rho = jax.random.uniform(key, (rx, ry), jnp.float32, -1.0, 1.0)

    # Geometry-only precompute (hoisted out of the forward pass).
    k_slab = jax.block_until_ready(
        precompute_demag_kz_rfft(nx, ny, 1, dx, dy, dz, z_off))

    forward = jax.jit(partial(
        wave_geometry_array_forward,
        dim=(nx, ny), dx=dx, dy=dy, dz=dz, B0=B0, r0=r0, dr=dr, dm=dm,
        z_off=z_off, rx=rx, ry=ry, Ms_CoPt=Ms_CoPt, beta=beta))

    B = jax.block_until_ready(forward(rho, k_slab))

    assert B.shape == (3, nx, ny), B.shape
    assert bool(jnp.all(jnp.isfinite(B)))
    print("KERNEL_OK")
</pallas_src>

<mosaic_0001>
module attributes {stable_mosaic.version = 11 : i64} {
  func.func @_cmul_kernel(%arg0: i32, %arg1: memref<6x1152xf32, #tpu.memory_space<vmem>>, %arg2: memref<2x1152xf32, #tpu.memory_space<vmem>>, %arg3: memref<6x1152xf32, #tpu.memory_space<vmem>>) attributes {dimension_semantics = [#tpu.dimension_semantics<parallel>], iteration_bounds = array<i64: 1>, scalar_prefetch = 0 : i64, scratch_operands = 0 : i64, tpu.core_type = #tpu.core_type<tc>, window_params = [{transform_indices = @transform_0, window_bounds = array<i64: 6, 1152>}, {transform_indices = @transform_1, window_bounds = array<i64: 2, 1152>}, {transform_indices = @transform_2, window_bounds = array<i64: 6, 1152>}]} {
    %c0 = arith.constant 0 : index
    %c0_0 = arith.constant 0 : index
    %0 = vector.load %arg1[%c0, %c0_0] : memref<6x1152xf32, #tpu.memory_space<vmem>>, vector<6x1152xf32>
    %c0_1 = arith.constant 0 : index
    %c0_2 = arith.constant 0 : index
    %1 = vector.load %arg2[%c0_1, %c0_2] : memref<2x1152xf32, #tpu.memory_space<vmem>>, vector<2x1152xf32>
    %2 = vector.extract_strided_slice %0 {offsets = [0, 0], sizes = [3, 1152], strides = [1, 1]} : vector<6x1152xf32> to vector<3x1152xf32>
    %3 = vector.extract_strided_slice %0 {offsets = [3, 0], sizes = [3, 1152], strides = [1, 1]} : vector<6x1152xf32> to vector<3x1152xf32>
    %4 = vector.extract_strided_slice %1 {offsets = [0, 0], sizes = [1, 1152], strides = [1, 1]} : vector<2x1152xf32> to vector<1x1152xf32>
    %5 = vector.extract_strided_slice %1 {offsets = [1, 0], sizes = [1, 1152], strides = [1, 1]} : vector<2x1152xf32> to vector<1x1152xf32>
    %6 = vector.broadcast %4 : vector<1x1152xf32> to vector<3x1152xf32>
    %7 = arith.mulf %2, %6 : vector<3x1152xf32>
    %8 = vector.broadcast %5 : vector<1x1152xf32> to vector<3x1152xf32>
    %9 = arith.mulf %3, %8 : vector<3x1152xf32>
    %10 = arith.subf %7, %9 : vector<3x1152xf32>
    %c0_3 = arith.constant 0 : index
    %c0_4 = arith.constant 0 : index
    %11 = vector.load %arg3[%c0_3, %c0_4] : memref<6x1152xf32, #tpu.memory_space<vmem>>, vector<3x1152xf32>
    tpu.vector_store %arg3[%c0_3, %c0_4], %10 {strides = array<i32>} : memref<6x1152xf32, #tpu.memory_space<vmem>>, vector<3x1152xf32>,
    %12 = vector.broadcast %5 : vector<1x1152xf32> to vector<3x1152xf32>
    %13 = arith.mulf %2, %12 : vector<3x1152xf32>
    %14 = vector.broadcast %4 : vector<1x1152xf32> to vector<3x1152xf32>
    %15 = arith.mulf %3, %14 : vector<3x1152xf32>
    %16 = arith.addf %13, %15 : vector<3x1152xf32>
    %c3 = arith.constant 3 : index
    %c0_5 = arith.constant 0 : index
    %17 = vector.load %arg3[%c3, %c0_5] : memref<6x1152xf32, #tpu.memory_space<vmem>>, vector<3x1152xf32>
    tpu.vector_store %arg3[%c3, %c0_5], %16 {strides = array<i32>} : memref<6x1152xf32, #tpu.memory_space<vmem>>, vector<3x1152xf32>,
    return
  }
  func.func @transform_0(%arg0: i32) -> (i32, i32) {
    %c0_i32 = arith.constant 0 : i32
    %c0_i32_0 = arith.constant 0 : i32
    return %c0_i32, %arg0 : i32, i32
  }
  func.func @transform_1(%arg0: i32) -> (i32, i32) {
    %c0_i32 = arith.constant 0 : i32
    %c0_i32_0 = arith.constant 0 : i32
    return %c0_i32, %arg0 : i32, i32
  }
  func.func @transform_2(%arg0: i32) -> (i32, i32) {
    %c0_i32 = arith.constant 0 : i32
    %c0_i32_0 = arith.constant 0 : i32
    return %c0_i32, %arg0 : i32, i32
  }
}

</mosaic_0001>

<llo_original>
// kernel: wave_geometry_array_forward.1
$region0: #{wave_geometry_array_forward.1}
  #allocation0 [shape = 'u32[]', space=smem, size = 0x4, offset = 0x4, fixed_abs, tag = 'smem constant byte address 0x4 - core index']
  #allocation1 [shape = 'u32[72,128]{1,0:T(1,128)}', space=vmem, size = 0x9000, scoped, tag = 'internal scratch']
  %s0 = inlined_call_operand.vmem [shape: f32[6,1152], index: 0, kind: input, shape index: {}]
  %s1 = inlined_call_operand.vmem [shape: f32[2,1152], index: 1, kind: input, shape index: {}]
  %s2 = inlined_call_operand.vmem [shape: f32[6,1152], index: 2, kind: output, shape index: {}]
  %s3 = sld [smem:[#allocation0]]
  $region18: #{wave_geometry_array_forward.1} parent=0
    _
  %s5 = ssub.s32 1, %s3
  %s6 = scalar_select 0, %s5, %s3
  // Predicated region
  $region2: #{wave_geometry_array_forward.1} parent=0 // pred_check
    _
  $region3: #{wave_geometry_array_forward.1} parent=0 // pred_check_branch
    %8 = sbr.rel (0) target = $region5
  $region4: #{wave_geometry_array_forward.1} parent=0 // pred_region
    _
  $region5: #{wave_geometry_array_forward.1} parent=0 // pred_fallthru
    _
  // Predicated region
  $region6: #{wave_geometry_array_forward.1} parent=0 // pred_check
    _
  $region7: #{wave_geometry_array_forward.1} parent=0 // pred_check_branch
    %10 = sbr.rel (0) target = $region9
  $region8: #{wave_geometry_array_forward.1} parent=0 // pred_region
    _
  $region9: #{wave_geometry_array_forward.1} parent=0 // pred_fallthru
    _
  %v11 = vld [vmem:[%s0] sm:$0x3f]
  %v12 = vld [vmem:[%s0 + $0x8] sm:$0x3f]
  %v13 = vld [vmem:[%s0 + $0x10] sm:$0x3f]
  %v14 = vld [vmem:[%s0 + $0x18] sm:$0x3f]
  %v15 = vld [vmem:[%s0 + $0x20] sm:$0x3f]
  %v16 = vld [vmem:[%s0 + $0x28] sm:$0x3f]
  %v17 = vld [vmem:[%s0 + $0x30] sm:$0x3f]
  %v18 = vld [vmem:[%s0 + $0x38] sm:$0x3f]
  %v19 = vld [vmem:[%s0 + $0x40] sm:$0x3f]
  %v20 = vld [vmem:[%s1] sm:$0xff]
  %v21 = vld [vmem:[%s1 + $0x8] sm:$0xff]
  %v22 = vld [vmem:[%s1 + $0x10] sm:$0x3]
  %v26 = vperm.slane %v20, 0
  %v27 = vperm.slane %v20, 2
  %v28 = vperm.slane %v20, 4
  %v29 = vperm.slane %v20, 6
  %v30 = vperm.slane %v21, 0
  %v31 = vperm.slane %v21, 2
  %v32 = vperm.slane %v21, 4
  %v33 = vperm.slane %v21, 6
  %v34 = vperm.slane %v22, 0
  %v44 = vperm.slane %v26, 0
  %v45 = vperm.slane %v27, 0
  %v46 = vperm.slane %v28, 0
  %v47 = vperm.slane %v29, 0
  %v48 = vperm.slane %v30, 0
  %v49 = vperm.slane %v31, 0
  %v50 = vperm.slane %v32, 0
  %v51 = vperm.slane %v33, 0
  %v52 = vperm.slane %v34, 0
  %v53 = vmul.f32 %v11, %v44
  %v54 = vmul.f32 %v12, %v45
  %v55 = vmul.f32 %v13, %v46
  %v56 = vmul.f32 %v14, %v47
  %v57 = vmul.f32 %v15, %v48
  %v58 = vmul.f32 %v16, %v49
  %v59 = vmul.f32 %v17, %v50
  %v60 = vmul.f32 %v18, %v51
  %v61 = vmul.f32 %v19, %v52
  %v62 = vperm.slane %v20, 1
  %v63 = vperm.slane %v20, 3
  %v64 = vperm.slane %v20, 5
  %v65 = vperm.slane %v20, 7
  %v66 = vperm.slane %v21, 1
  %v67 = vperm.slane %v21, 3
  %v68 = vperm.slane %v21, 5
  %v69 = vperm.slane %v21, 7
  %v70 = vperm.slane %v22, 1
  %v80 = vperm.slane %v62, 1
  %v81 = vperm.slane %v63, 1
  %v82 = vperm.slane %v64, 1
  %v83 = vperm.slane %v65, 1
  %v84 = vperm.slane %v66, 1
  %v85 = vperm.slane %v67, 1
  %v86 = vperm.slane %v68, 1
  %v87 = vperm.slane %v69, 1
  %v88 = vperm.slane %v70, 1
  %v89 = vmul.f32 %v11, %v80
  %v90 = vmul.f32 %v12, %v81
  %v91 = vmul.f32 %v13, %v82
  %v92 = vmul.f32 %v14, %v83
  %v93 = vmul.f32 %v15, %v84
  %v94 = vmul.f32 %v16, %v85
  %v95 = vmul.f32 %v17, %v86
  %v96 = vmul.f32 %v18, %v87
  %v97 = vmul.f32 %v19, %v88
  %v107 = vrot.slane %v89, 3
  %v108 = vrot.slane %v90, 3
  %v109 = vrot.slane %v91, 3
  %v110 = vrot.slane %v92, 3
  %v111 = vrot.slane %v93, 3
  %v112 = vrot.slane %v94, 3
  %v113 = vrot.slane %v95, 3
  %v114 = vrot.slane %v96, 3
  %v115 = vrot.slane %v97, 3
  %v125 = vsub.f32 %v53, %v107
  %v126 = vsub.f32 %v54, %v108
  %v127 = vsub.f32 %v55, %v109
  %v128 = vsub.f32 %v56, %v110
  %v129 = vsub.f32 %v57, %v111
  %v130 = vsub.f32 %v58, %v112
  %v131 = vsub.f32 %v59, %v113
  %v132 = vsub.f32 %v60, %v114
  %v133 = vsub.f32 %v61, %v115
  %134 = vst [vmem:[%s2] sm:$0x7] %v125
  %135 = vst [vmem:[%s2 + $0x8] sm:$0x7] %v126
  %136 = vst [vmem:[%s2 + $0x10] sm:$0x7] %v127
  %137 = vst [vmem:[%s2 + $0x18] sm:$0x7] %v128
  %138 = vst [vmem:[%s2 + $0x20] sm:$0x7] %v129
  %139 = vst [vmem:[%s2 + $0x28] sm:$0x7] %v130
  %140 = vst [vmem:[%s2 + $0x30] sm:$0x7] %v131
  %141 = vst [vmem:[%s2 + $0x38] sm:$0x7] %v132
  %142 = vst [vmem:[%s2 + $0x40] sm:$0x7] %v133
  %v152 = vrot.slane %v53, 3
  %v153 = vrot.slane %v54, 3
  %v154 = vrot.slane %v55, 3
  %v155 = vrot.slane %v56, 3
  %v156 = vrot.slane %v57, 3
  %v157 = vrot.slane %v58, 3
  %v158 = vrot.slane %v59, 3
  %v159 = vrot.slane %v60, 3
  %v160 = vrot.slane %v61, 3
  %v170 = vadd.f32 %v89, %v152
  %v171 = vadd.f32 %v90, %v153
  %v172 = vadd.f32 %v91, %v154
  %v173 = vadd.f32 %v92, %v155
  %v174 = vadd.f32 %v93, %v156
  %v175 = vadd.f32 %v94, %v157
  %v176 = vadd.f32 %v95, %v158
  %v177 = vadd.f32 %v96, %v159
  %v178 = vadd.f32 %v97, %v160
  %v188 = vrot.slane %v170, 5
  %v189 = vrot.slane %v171, 5
  %v190 = vrot.slane %v172, 5
  %v191 = vrot.slane %v173, 5
  %v192 = vrot.slane %v174, 5
  %v193 = vrot.slane %v175, 5
  %v194 = vrot.slane %v176, 5
  %v195 = vrot.slane %v177, 5
  %v196 = vrot.slane %v178, 5
  %206 = vst [vmem:[%s2] sm:$0x38] %v188
  %207 = vst [vmem:[%s2 + $0x8] sm:$0x38] %v189
  %208 = vst [vmem:[%s2 + $0x10] sm:$0x38] %v190
  %209 = vst [vmem:[%s2 + $0x18] sm:$0x38] %v191
  %210 = vst [vmem:[%s2 + $0x20] sm:$0x38] %v192
  %211 = vst [vmem:[%s2 + $0x28] sm:$0x38] %v193
  %212 = vst [vmem:[%s2 + $0x30] sm:$0x38] %v194
  %213 = vst [vmem:[%s2 + $0x38] sm:$0x38] %v195
  %214 = vst [vmem:[%s2 + $0x40] sm:$0x38] %v196
  // Predicated region
  $region10: #{wave_geometry_array_forward.1} parent=0 // pred_check
    _
  $region11: #{wave_geometry_array_forward.1} parent=0 // pred_check_branch
    %216 = sbr.rel (0) target = $region13
  $region12: #{wave_geometry_array_forward.1} parent=0 // pred_region
    _
  $region13: #{wave_geometry_array_forward.1} parent=0 // pred_fallthru
    _
  // Predicated region
  $region14: #{wave_geometry_array_forward.1} parent=0 // pred_check
    _
  $region15: #{wave_geometry_array_forward.1} parent=0 // pred_check_branch
    %218 = sbr.rel (0) target = $region17
  $region16: #{wave_geometry_array_forward.1} parent=0 // pred_region
    _
  $region17: #{wave_geometry_array_forward.1} parent=0 // pred_fallthru
    _

// kernel: reverse.1
$region0: #{reverse.1}
  #allocation0 [shape = 's32[1]{0}', space=sflag, size = 0x4, scoped, tag = 'scoped memory for reverse.1']
  %s0 = inlined_call_operand.vmem [shape: f32[3,32,2,15], index: 0, kind: input, shape index: {}]
  %s1 = inlined_call_operand.vmem [shape: f32[3,32,2,15], index: 1, kind: output, shape index: {}]
  %s2 = scalar_lea.vmem %s0, 28
  %v3 = vld [vmem:[%s2] sm:$0x3]
  %4 = vst [vmem:[%s1] sm:$0x3] %v3
  %s5 = scalar_lea.vmem %s0, 58
  %v6 = vld [vmem:[%s5] sm:$0x3]
  %s7 = scalar_lea.vmem %s1, 30
  %8 = vst [vmem:[%s7] sm:$0x3] %v6
  %s9 = scalar_lea.vmem %s0, 88
  %v10 = vld [vmem:[%s9] sm:$0x3]
  %s11 = scalar_lea.vmem %s1, 60
  %12 = vst [vmem:[%s11] sm:$0x3] %v10
  %s13 = scalar_lea.vmem %s0, 26
  %v14 = vld [vmem:[%s13] sm:$0x3]
  %s15 = scalar_lea.vmem %s1, 2
  %16 = vst [vmem:[%s15] sm:$0x3] %v14
  %s17 = scalar_lea.vmem %s0, 56
  %v18 = vld [vmem:[%s17] sm:$0x3]
  %s19 = scalar_lea.vmem %s1, 32
  %20 = vst [vmem:[%s19] sm:$0x3] %v18
  %s21 = scalar_lea.vmem %s0, 86
  %v22 = vld [vmem:[%s21] sm:$0x3]
  %s23 = scalar_lea.vmem %s1, 62
  %24 = vst [vmem:[%s23] sm:$0x3] %v22
  %s25 = scalar_lea.vmem %s0, 24
  %v26 = vld [vmem:[%s25] sm:$0x3]
  %s27 = scalar_lea.vmem %s1, 4
  %28 = vst [vmem:[%s27] sm:$0x3] %v26
  %s29 = scalar_lea.vmem %s0, 54
  %v30 = vld [vmem:[%s29] sm:$0x3]
  %s31 = scalar_lea.vmem %s1, 34
  %32 = vst [vmem:[%s31] sm:$0x3] %v30
  %s33 = scalar_lea.vmem %s0, 84
  %v34 = vld [vmem:[%s33] sm:$0x3]
  %s35 = scalar_lea.vmem %s1, 64
  %36 = vst [vmem:[%s35] sm:$0x3] %v34
  %s37 = scalar_lea.vmem %s0, 22
  %v38 = vld [vmem:[%s37] sm:$0x3]
  %s39 = scalar_lea.vmem %s1, 6
  %40 = vst [vmem:[%s39] sm:$0x3] %v38
  %s41 = scalar_lea.vmem %s0, 52
  %v42 = vld [vmem:[%s41] sm:$0x3]
  %s43 = scalar_lea.vmem %s1, 36
  %44 = vst [vmem:[%s43] sm:$0x3] %v42
  %s45 = scalar_lea.vmem %s0, 82
  %v46 = vld [vmem:[%s45] sm:$0x3]
  %s47 = scalar_lea.vmem %s1, 66
  %48 = vst [vmem:[%s47] sm:$0x3] %v46
  %s49 = scalar_lea.vmem %s0, 20
  %v50 = vld [vmem:[%s49] sm:$0x3]
  %s51 = scalar_lea.vmem %s1, 8
  %52 = vst [vmem:[%s51] sm:$0x3] %v50
  %s53 = scalar_lea.vmem %s0, 50
  %v54 = vld [vmem:[%s53] sm:$0x3]
  %s55 = scalar_lea.vmem %s1, 38
  %56 = vst [vmem:[%s55] sm:$0x3] %v54
  %s57 = scalar_lea.vmem %s0, 80
  %v58 = vld [vmem:[%s57] sm:$0x3]
  %s59 = scalar_lea.vmem %s1, 68
  %60 = vst [vmem:[%s59] sm:$0x3] %v58
  %s61 = scalar_lea.vmem %s0, 18
  %v62 = vld [vmem:[%s61] sm:$0x3]
  %s63 = scalar_lea.vmem %s1, 10
  %64 = vst [vmem:[%s63] sm:$0x3] %v62
  %s65 = scalar_lea.vmem %s0, 48
  %v66 = vld [vmem:[%s65] sm:$0x3]
  %s67 = scalar_lea.vmem %s1, 40
  %68 = vst [vmem:[%s67] sm:$0x3] %v66
  %s69 = scalar_lea.vmem %s0, 78
  %v70 = vld [vmem:[%s69] sm:$0x3]
  %s71 = scalar_lea.vmem %s1, 70
  %72 = vst [vmem:[%s71] sm:$0x3] %v70
  %s73 = scalar_lea.vmem %s0, 16
  %v74 = vld [vmem:[%s73] sm:$0x3]
  %s75 = scalar_lea.vmem %s1, 12
  %76 = vst [vmem:[%s75] sm:$0x3] %v74
  %s77 = scalar_lea.vmem %s0, 46
  %v78 = vld [vmem:[%s77] sm:$0x3]
  %s79 = scalar_lea.vmem %s1, 42
  %80 = vst [vmem:[%s79] sm:$0x3] %v78
  %s81 = scalar_lea.vmem %s0, 76
  %v82 = vld [vmem:[%s81] sm:$0x3]
  %s83 = scalar_lea.vmem %s1, 72
  %84 = vst [vmem:[%s83] sm:$0x3] %v82
  %s85 = scalar_lea.vmem %s0, 14
  %v86 = vld [vmem:[%s85] sm:$0x3]
  %s87 = scalar_lea.vmem %s1, 14
  %88 = vst [vmem:[%s87] sm:$0x3] %v86
  %s89 = scalar_lea.vmem %s0, 44
  %v90 = vld [vmem:[%s89] sm:$0x3]
  %s91 = scalar_lea.vmem %s1, 44
  %92 = vst [vmem:[%s91] sm:$0x3] %v90
  %s93 = scalar_lea.vmem %s0, 74
  %v94 = vld [vmem:[%s93] sm:$0x3]
  %s95 = scalar_lea.vmem %s1, 74
  %96 = vst [vmem:[%s95] sm:$0x3] %v94
  %s97 = scalar_lea.vmem %s0, 12
  %v98 = vld [vmem:[%s97] sm:$0x3]
  %s99 = scalar_lea.vmem %s1, 16
  %100 = vst [vmem:[%s99] sm:$0x3] %v98
  %s101 = scalar_lea.vmem %s0, 42
  %v102 = vld [vmem:[%s101] sm:$0x3]
  %s103 = scalar_lea.vmem %s1, 46
  %104 = vst [vmem:[%s103] sm:$0x3] %v102
  %s105 = scalar_lea.vmem %s0, 72
  %v106 = vld [vmem:[%s105] sm:$0x3]
  %s107 = scalar_lea.vmem %s1, 76
  %108 = vst [vmem:[%s107] sm:$0x3] %v106
  %s109 = scalar_lea.vmem %s0, 10
  %v110 = vld [vmem:[%s109] sm:$0x3]
  %s111 = scalar_lea.vmem %s1, 18
  %112 = vst [vmem:[%s111] sm:$0x3] %v110
  %s113 = scalar_lea.vmem %s0, 40
  %v114 = vld [vmem:[%s113] sm:$0x3]
  %s115 = scalar_lea.vmem %s1, 48
  %116 = vst [vmem:[%s115] sm:$0x3] %v114
  %s117 = scalar_lea.vmem %s0, 70
  %v118 = vld [vmem:[%s117] sm:$0x3]
  %s119 = scalar_lea.vmem %s1, 78
  %120 = vst [vmem:[%s119] sm:$0x3] %v118
  %s121 = scalar_lea.vmem %s0, 8
  %v122 = vld [vmem:[%s121] sm:$0x3]
  %s123 = scalar_lea.vmem %s1, 20
  %124 = vst [vmem:[%s123] sm:$0x3] %v122
  %s125 = scalar_lea.vmem %s0, 38
  %v126 = vld [vmem:[%s125] sm:$0x3]
  %s127 = scalar_lea.vmem %s1, 50
  %128 = vst [vmem:[%s127] sm:$0x3] %v126
  %s129 = scalar_lea.vmem %s0, 68
  %v130 = vld [vmem:[%s129] sm:$0x3]
  %s131 = scalar_lea.vmem %s1, 80
  %132 = vst [vmem:[%s131] sm:$0x3] %v130
  %s133 = scalar_lea.vmem %s0, 6
  %v134 = vld [vmem:[%s133] sm:$0x3]
  %s135 = scalar_lea.vmem %s1, 22
  %136 = vst [vmem:[%s135] sm:$0x3] %v134
  %s137 = scalar_lea.vmem %s0, 36
  %v138 = vld [vmem:[%s137] sm:$0x3]
  %s139 = scalar_lea.vmem %s1, 52
  %140 = vst [vmem:[%s139] sm:$0x3] %v138
  %s141 = scalar_lea.vmem %s0, 66
  %v142 = vld [vmem:[%s141] sm:$0x3]
  %s143 = scalar_lea.vmem %s1, 82
  %144 = vst [vmem:[%s143] sm:$0x3] %v142
  %s145 = scalar_lea.vmem %s0, 4
  %v146 = vld [vmem:[%s145] sm:$0x3]
  %s147 = scalar_lea.vmem %s1, 24
  %148 = vst [vmem:[%s147] sm:$0x3] %v146
  %s149 = scalar_lea.vmem %s0, 34
  %v150 = vld [vmem:[%s149] sm:$0x3]
  %s151 = scalar_lea.vmem %s1, 54
  %152 = vst [vmem:[%s151] sm:$0x3] %v150
  %s153 = scalar_lea.vmem %s0, 64
  %v154 = vld [vmem:[%s153] sm:$0x3]
  %s155 = scalar_lea.vmem %s1, 84
  %156 = vst [vmem:[%s155] sm:$0x3] %v154
  %s157 = scalar_lea.vmem %s0, 2
  %v158 = vld [vmem:[%s157] sm:$0x3]
  %s159 = scalar_lea.vmem %s1, 26
  %160 = vst [vmem:[%s159] sm:$0x3] %v158
  %s161 = scalar_lea.vmem %s0, 32
  %v162 = vld [vmem:[%s161] sm:$0x3]
  %s163 = scalar_lea.vmem %s1, 56
  %164 = vst [vmem:[%s163] sm:$0x3] %v162
  %s165 = scalar_lea.vmem %s0, 62
  %v166 = vld [vmem:[%s165] sm:$0x3]
  %s167 = scalar_lea.vmem %s1, 86
  %168 = vst [vmem:[%s167] sm:$0x3] %v166
  %v169 = vld [vmem:[%s0] sm:$0x3]
  %s170 = scalar_lea.vmem %s1, 28
  %171 = vst [vmem:[%s170] sm:$0x3] %v169
  %s172 = scalar_lea.vmem %s0, 30
  %v173 = vld [vmem:[%s172] sm:$0x3]
  %s174 = scalar_lea.vmem %s1, 58
  %175 = vst [vmem:[%s174] sm:$0x3] %v173
  %s176 = scalar_lea.vmem %s0, 60
  %v177 = vld [vmem:[%s176] sm:$0x3]
  %s178 = scalar_lea.vmem %s1, 88
  %179 = vst [vmem:[%s178] sm:$0x3] %v177

</llo_original>
